<compile_context>
chip_gen: v7x
topology: tpu7x:2x2x1
jax: 0.10.0
libtpu: 0.0.40
codegen_flags: <defaults>
</compile_context>

<pallas_src>
import math
import jax
import jax.numpy as jnp
from jax import lax
from jax.experimental import pallas as pl
from jax.experimental.pallas import tpu as pltpu

# Module hyper-parameters (defaults of GaussianPolicyNetwork.__init__)
LOG_STD_MIN = -20.0
LOG_STD_MAX = 2.0
MIN_STD = 1e-4
STD_INIT_BIAS = 0.0

_INV_SQRT2 = 1.0 / math.sqrt(2.0)


def _gelu_exact(x):
    # nn.GELU() default is the exact erf-based GELU (computed in f32).
    return 0.5 * x * (1.0 + lax.erf(x * _INV_SQRT2))


def _round_up(n, m):
    return ((n + m - 1) // m) * m


def _make_kernel(hidden, out_features, out_pad):
    H, OUT = hidden, out_features

    def kernel(x_ref, w1_ref, w2_ref, wh1_ref, wh2_ref, bias_ref, out_ref):
        # Hoisted bias loads from the single packed (4, BW) f32 array.
        b1 = bias_ref[0:1, 0:H]            # shared layer 1
        b2 = bias_ref[1:2, 0:H]            # shared layer 2
        bh1 = bias_ref[2:3, 0:2 * H]       # [bm1 | bs1]
        bh2 = bias_ref[3:4, 0:out_pad]     # [bm2 | bs2 | 0-pad]

        # Shared MLP: Linear -> GELU -> Linear -> GELU  (bf16 MXU, f32 accum).
        h = jnp.dot(x_ref[...], w1_ref[...],
                    preferred_element_type=jnp.float32) + b1
        h = _gelu_exact(h).astype(jnp.bfloat16)
        h = jnp.dot(h, w2_ref[...],
                    preferred_element_type=jnp.float32) + b2
        h = _gelu_exact(h).astype(jnp.bfloat16)

        # Fused heads, layer 1: h @ [wm1 | ws1] -> (TB, 2H), single GELU.
        hh = jnp.dot(h, wh1_ref[...],
                     preferred_element_type=jnp.float32) + bh1
        hh = _gelu_exact(hh).astype(jnp.bfloat16)

        # Fused heads, layer 2: block-diag([wm2, ws2]) padded to (2H, OUT_PAD).
        # raw[:, :OUT]      = mean_head output
        # raw[:, OUT:2*OUT] = std_param_head output
        raw = jnp.dot(hh, wh2_ref[...],
                      preferred_element_type=jnp.float32) + bh2

        # Epilogue: std columns -> clamp -> softplus -> +min_std -> log;
        # mean columns pass through.  Single lane-dense store.
        col = lax.broadcasted_iota(jnp.int32, raw.shape, 1)
        is_std = (col >= OUT) & (col < 2 * OUT)
        clipped = jnp.clip(raw, LOG_STD_MIN, LOG_STD_MAX)
        # clamped max is 2.0 -> log1p(exp(x)) matches F.softplus exactly here.
        log_std = jnp.log(jnp.log1p(jnp.exp(clipped)) + MIN_STD)
        out_ref[...] = jnp.where(is_std, log_std, raw).astype(out_ref.dtype)

    return kernel


def gaussian_policy_forward(x, params, *, batch_block=256):
    """x: (B, in_features) f32 -> (mean, log_std), each (B, out_features) f32."""
    B, in_features = x.shape
    H = params["w1"].shape[1]
    OUT = params["wm2"].shape[1]
    OUT_PAD = _round_up(2 * OUT, 128)               # lane-dense output width
    BW = _round_up(max(2 * H, OUT_PAD), 128)        # packed-bias row width

    # ---- parameter packing / bf16 casting (plain JAX, outside the kernel) ----
    w1 = params["w1"].astype(jnp.bfloat16)
    w2 = params["w2"].astype(jnp.bfloat16)
    wh1 = jnp.concatenate([params["wm1"], params["ws1"]], axis=1).astype(jnp.bfloat16)

    wh2 = jnp.zeros((2 * H, OUT_PAD), jnp.float32)
    wh2 = wh2.at[:H, :OUT].set(params["wm2"])
    wh2 = wh2.at[H:, OUT:2 * OUT].set(params["ws2"])
    wh2 = wh2.astype(jnp.bfloat16)

    biases = jnp.zeros((4, BW), jnp.float32)
    biases = biases.at[0, :H].set(params["b1"].reshape(-1))
    biases = biases.at[1, :H].set(params["b2"].reshape(-1))
    biases = biases.at[2, :H].set(params["bm1"].reshape(-1))
    biases = biases.at[2, H:2 * H].set(params["bs1"].reshape(-1))
    biases = biases.at[3, :OUT].set(params["bm2"].reshape(-1))
    biases = biases.at[3, OUT:2 * OUT].set(params["bs2"].reshape(-1))

    # ---- batch tiling ----
    TB = min(batch_block, _round_up(B, 8))
    B_pad = _round_up(B, TB)
    x_p = x.astype(jnp.bfloat16)
    if B_pad != B:
        x_p = jnp.pad(x_p, ((0, B_pad - B), (0, 0)))
    grid = (B_pad // TB,)

    kernel = _make_kernel(H, OUT, OUT_PAD)

    def resident(shape):
        # Full-array block, constant index map -> stays VMEM-resident across steps.
        return pl.BlockSpec(shape, lambda i: (0, 0))

    out = pl.pallas_call(
        kernel,
        out_shape=jax.ShapeDtypeStruct((B_pad, OUT_PAD), jnp.float32),
        grid=grid,
        in_specs=[
            pl.BlockSpec((TB, in_features), lambda i: (i, 0)),   # x tile
            resident(w1.shape),
            resident(w2.shape),
            resident(wh1.shape),
            resident(wh2.shape),
            resident(biases.shape),
        ],
        out_specs=pl.BlockSpec((TB, OUT_PAD), lambda i: (i, 0)),
        compiler_params=pltpu.CompilerParams(
            dimension_semantics=("parallel",)),
    )(x_p, w1, w2, wh1, wh2, biases)

    mean = out[:B, :OUT]
    log_std = out[:B, OUT:2 * OUT]
    return mean, log_std


def init_params(key, in_features, out_features, hidden_size,
                linear_init_scale=1.0, std_init_bias=STD_INIT_BIAS):
    """Deterministic synthetic init (GELU-friendly scaled normal; biases zero,
    except std-head output bias = std_init_bias, matching __init__)."""
    def linear(k, fan_in, fan_out):
        std = linear_init_scale / math.sqrt(fan_in)
        w = jax.random.normal(k, (fan_in, fan_out), jnp.float32) * std
        b = jnp.zeros((1, fan_out), jnp.float32)
        return w, b

    ks = jax.random.split(key, 6)
    w1, b1 = linear(ks[0], in_features, hidden_size)
    w2, b2 = linear(ks[1], hidden_size, hidden_size)
    wm1, bm1 = linear(ks[2], hidden_size, hidden_size)
    wm2, bm2 = linear(ks[3], hidden_size, out_features)
    ws1, bs1 = linear(ks[4], hidden_size, hidden_size)
    ws2, _ = linear(ks[5], hidden_size, out_features)
    bs2 = jnp.full((1, out_features), std_init_bias, jnp.float32)
    return dict(w1=w1, b1=b1, w2=w2, b2=b2,
                wm1=wm1, bm1=bm1, wm2=wm2, bm2=bm2,
                ws1=ws1, bs1=bs1, ws2=ws2, bs2=bs2)


def _reference_forward(x, p):
    """Pure-JAX f32 reference mirroring the PyTorch forward()."""
    g = lambda v: 0.5 * v * (1.0 + lax.erf(v * _INV_SQRT2))
    h = g(x @ p["w1"] + p["b1"])
    h = g(h @ p["w2"] + p["b2"])
    mean = g(h @ p["wm1"] + p["bm1"]) @ p["wm2"] + p["bm2"]
    sp = g(h @ p["ws1"] + p["bs1"]) @ p["ws2"] + p["bs2"]
    sp = jnp.clip(sp, LOG_STD_MIN, LOG_STD_MAX)
    std = jnp.log1p(jnp.exp(sp)) + MIN_STD
    return mean, jnp.log(std)


if __name__ == "__main__":
    # TODO(synk): get_actions / recompute_log_probs (Normal sampling, log_prob,
    # entropy) are not part of this kernel; only forward() is implemented.
    in_features, out_features, hidden_size = 32, 8, 32
    batch = 8

    key = jax.random.PRNGKey(0)
    k_x, k_p = jax.random.split(key)
    x = jax.random.normal(k_x, (batch, in_features), jnp.float32)
    params = init_params(k_p, in_features, out_features, hidden_size)

    fwd = jax.jit(gaussian_policy_forward)
    mean, log_std = fwd(x, params)
    jax.block_until_ready((mean, log_std))

    ref_mean, ref_log_std = _reference_forward(x, params)
    assert mean.shape == (batch, out_features)
    assert log_std.shape == (batch, out_features)
    # bf16 matmul operands (f32 accumulation) -> relaxed tolerance vs f32 reference.
    assert jnp.allclose(mean, ref_mean, atol=5e-2, rtol=5e-2)
    assert jnp.allclose(log_std, ref_log_std, atol=5e-2, rtol=5e-2)

    print("KERNEL_OK")
</pallas_src>

<mosaic_0001>
module attributes {stable_mosaic.version = 11 : i64} {
  func.func @kernel(%arg0: i32, %arg1: memref<8x32xbf16, #tpu.memory_space<vmem>>, %arg2: memref<32x32xbf16, #tpu.memory_space<vmem>>, %arg3: memref<32x32xbf16, #tpu.memory_space<vmem>>, %arg4: memref<32x64xbf16, #tpu.memory_space<vmem>>, %arg5: memref<64x128xbf16, #tpu.memory_space<vmem>>, %arg6: memref<4x128xf32, #tpu.memory_space<vmem>>, %arg7: memref<8x128xf32, #tpu.memory_space<vmem>>) attributes {dimension_semantics = [#tpu.dimension_semantics<parallel>], iteration_bounds = array<i64: 1>, scalar_prefetch = 0 : i64, scratch_operands = 0 : i64, tpu.core_type = #tpu.core_type<tc>, window_params = [{transform_indices = @transform_0, window_bounds = array<i64: 8, 32>}, {pipeline_mode = #tpu.pipeline_mode<synchronous>, transform_indices = @transform_1, window_bounds = array<i64: 32, 32>}, {pipeline_mode = #tpu.pipeline_mode<synchronous>, transform_indices = @transform_2, window_bounds = array<i64: 32, 32>}, {pipeline_mode = #tpu.pipeline_mode<synchronous>, transform_indices = @transform_3, window_bounds = array<i64: 32, 64>}, {pipeline_mode = #tpu.pipeline_mode<synchronous>, transform_indices = @transform_4, window_bounds = array<i64: 64, 128>}, {pipeline_mode = #tpu.pipeline_mode<synchronous>, transform_indices = @transform_5, window_bounds = array<i64: 4, 128>}, {transform_indices = @transform_6, window_bounds = array<i64: 8, 128>}]} {
    %c0 = arith.constant 0 : index
    %c0_0 = arith.constant 0 : index
    %0 = vector.load %arg6[%c0, %c0_0] : memref<4x128xf32, #tpu.memory_space<vmem>>, vector<1x32xf32>
    %c1 = arith.constant 1 : index
    %c0_1 = arith.constant 0 : index
    %1 = vector.load %arg6[%c1, %c0_1] : memref<4x128xf32, #tpu.memory_space<vmem>>, vector<1x32xf32>
    %c2 = arith.constant 2 : index
    %c0_2 = arith.constant 0 : index
    %2 = vector.load %arg6[%c2, %c0_2] : memref<4x128xf32, #tpu.memory_space<vmem>>, vector<1x64xf32>
    %c3 = arith.constant 3 : index
    %c0_3 = arith.constant 0 : index
    %3 = vector.load %arg6[%c3, %c0_3] : memref<4x128xf32, #tpu.memory_space<vmem>>, vector<1x128xf32>
    %c0_4 = arith.constant 0 : index
    %c0_5 = arith.constant 0 : index
    %4 = vector.load %arg1[%c0_4, %c0_5] : memref<8x32xbf16, #tpu.memory_space<vmem>>, vector<8x32xbf16>
    %c0_6 = arith.constant 0 : index
    %c0_7 = arith.constant 0 : index
    %5 = vector.load %arg2[%c0_6, %c0_7] : memref<32x32xbf16, #tpu.memory_space<vmem>>, vector<32x32xbf16>
    %cst = arith.constant dense<0.000000e+00> : vector<8x32xf32>
    %6 = tpu.matmul %4, %5, %cst {dimension_numbers = #tpu.dot_dimension_numbers<[1], [0], [0], [1], [0, 0, 1, 1], [], []>} : vector<8x32xbf16>, vector<32x32xbf16>, vector<8x32xf32> -> vector<8x32xf32>
    %7 = vector.broadcast %0 : vector<1x32xf32> to vector<8x32xf32>
    %8 = arith.addf %6, %7 : vector<8x32xf32>
    %cst_8 = arith.constant 5.000000e-01 : f32
    %9 = vector.broadcast %cst_8 : f32 to vector<8x32xf32>
    %10 = arith.mulf %9, %8 : vector<8x32xf32>
    %cst_9 = arith.constant 0.707106769 : f32
    %11 = vector.broadcast %cst_9 : f32 to vector<8x32xf32>
    %12 = arith.mulf %8, %11 : vector<8x32xf32>
    %13 = math.erf %12 : vector<8x32xf32>
    %cst_10 = arith.constant 1.000000e+00 : f32
    %14 = vector.broadcast %cst_10 : f32 to vector<8x32xf32>
    %15 = arith.addf %14, %13 : vector<8x32xf32>
    %16 = arith.mulf %10, %15 : vector<8x32xf32>
    %17 = arith.truncf %16 : vector<8x32xf32> to vector<8x32xbf16>
    %c0_11 = arith.constant 0 : index
    %c0_12 = arith.constant 0 : index
    %18 = vector.load %arg3[%c0_11, %c0_12] : memref<32x32xbf16, #tpu.memory_space<vmem>>, vector<32x32xbf16>
    %cst_13 = arith.constant dense<0.000000e+00> : vector<8x32xf32>
    %19 = tpu.matmul %17, %18, %cst_13 {dimension_numbers = #tpu.dot_dimension_numbers<[1], [0], [0], [1], [0, 0, 1, 1], [], []>} : vector<8x32xbf16>, vector<32x32xbf16>, vector<8x32xf32> -> vector<8x32xf32>
    %20 = vector.broadcast %1 : vector<1x32xf32> to vector<8x32xf32>
    %21 = arith.addf %19, %20 : vector<8x32xf32>
    %cst_14 = arith.constant 5.000000e-01 : f32
    %22 = vector.broadcast %cst_14 : f32 to vector<8x32xf32>
    %23 = arith.mulf %22, %21 : vector<8x32xf32>
    %cst_15 = arith.constant 0.707106769 : f32
    %24 = vector.broadcast %cst_15 : f32 to vector<8x32xf32>
    %25 = arith.mulf %21, %24 : vector<8x32xf32>
    %26 = math.erf %25 : vector<8x32xf32>
    %cst_16 = arith.constant 1.000000e+00 : f32
    %27 = vector.broadcast %cst_16 : f32 to vector<8x32xf32>
    %28 = arith.addf %27, %26 : vector<8x32xf32>
    %29 = arith.mulf %23, %28 : vector<8x32xf32>
    %30 = arith.truncf %29 : vector<8x32xf32> to vector<8x32xbf16>
    %c0_17 = arith.constant 0 : index
    %c0_18 = arith.constant 0 : index
    %31 = vector.load %arg4[%c0_17, %c0_18] : memref<32x64xbf16, #tpu.memory_space<vmem>>, vector<32x64xbf16>
    %cst_19 = arith.constant dense<0.000000e+00> : vector<8x64xf32>
    %32 = tpu.matmul %30, %31, %cst_19 {dimension_numbers = #tpu.dot_dimension_numbers<[1], [0], [0], [1], [0, 0, 1, 1], [], []>} : vector<8x32xbf16>, vector<32x64xbf16>, vector<8x64xf32> -> vector<8x64xf32>
    %33 = vector.broadcast %2 : vector<1x64xf32> to vector<8x64xf32>
    %34 = arith.addf %32, %33 : vector<8x64xf32>
    %cst_20 = arith.constant 5.000000e-01 : f32
    %35 = vector.broadcast %cst_20 : f32 to vector<8x64xf32>
    %36 = arith.mulf %35, %34 : vector<8x64xf32>
    %cst_21 = arith.constant 0.707106769 : f32
    %37 = vector.broadcast %cst_21 : f32 to vector<8x64xf32>
    %38 = arith.mulf %34, %37 : vector<8x64xf32>
    %39 = math.erf %38 : vector<8x64xf32>
    %cst_22 = arith.constant 1.000000e+00 : f32
    %40 = vector.broadcast %cst_22 : f32 to vector<8x64xf32>
    %41 = arith.addf %40, %39 : vector<8x64xf32>
    %42 = arith.mulf %36, %41 : vector<8x64xf32>
    %43 = arith.truncf %42 : vector<8x64xf32> to vector<8x64xbf16>
    %c0_23 = arith.constant 0 : index
    %c0_24 = arith.constant 0 : index
    %44 = vector.load %arg5[%c0_23, %c0_24] : memref<64x128xbf16, #tpu.memory_space<vmem>>, vector<64x128xbf16>
    %cst_25 = arith.constant dense<0.000000e+00> : vector<8x128xf32>
    %45 = tpu.matmul %43, %44, %cst_25 {dimension_numbers = #tpu.dot_dimension_numbers<[1], [0], [0], [1], [0, 0, 1, 1], [], []>} : vector<8x64xbf16>, vector<64x128xbf16>, vector<8x128xf32> -> vector<8x128xf32>
    %46 = vector.broadcast %3 : vector<1x128xf32> to vector<8x128xf32>
    %47 = arith.addf %45, %46 : vector<8x128xf32>
    %48 = tpu.iota {dimensions = array<i32: 1>} : vector<8x128xi32>
    %c8_i32 = arith.constant 8 : i32
    %49 = vector.broadcast %c8_i32 : i32 to vector<8x128xi32>
    %50 = arith.cmpi sge, %48, %49 : vector<8x128xi32>
    %c16_i32 = arith.constant 16 : i32
    %51 = vector.broadcast %c16_i32 : i32 to vector<8x128xi32>
    %52 = arith.cmpi slt, %48, %51 : vector<8x128xi32>
    %53 = arith.andi %50, %52 : vector<8x128xi1>
    %cst_26 = arith.constant -2.000000e+01 : f32
    %cst_27 = arith.constant 2.000000e+00 : f32
    %54 = vector.broadcast %cst_26 : f32 to vector<8x128xf32>
    %55 = arith.maximumf %54, %47 : vector<8x128xf32>
    %56 = vector.broadcast %cst_27 : f32 to vector<8x128xf32>
    %57 = arith.minimumf %56, %55 : vector<8x128xf32>
    %58 = math.exp %57 : vector<8x128xf32>
    %59 = math.log1p %58 : vector<8x128xf32>
    %cst_28 = arith.constant 9.99999974E-5 : f32
    %60 = vector.broadcast %cst_28 : f32 to vector<8x128xf32>
    %61 = arith.addf %59, %60 : vector<8x128xf32>
    %62 = math.log %61 : vector<8x128xf32>
    %63 = arith.select %53, %62, %47 : vector<8x128xi1>, vector<8x128xf32>
    %c0_29 = arith.constant 0 : index
    %c0_30 = arith.constant 0 : index
    %64 = vector.load %arg7[%c0_29, %c0_30] : memref<8x128xf32, #tpu.memory_space<vmem>>, vector<8x128xf32>
    tpu.vector_store %arg7[%c0_29, %c0_30], %63 {strides = array<i32>} : memref<8x128xf32, #tpu.memory_space<vmem>>, vector<8x128xf32>,
    return
  }
  func.func @transform_0(%arg0: i32) -> (i32, i32) {
    %c0_i32 = arith.constant 0 : i32
    %c0_i32_0 = arith.constant 0 : i32
    return %arg0, %c0_i32 : i32, i32
  }
  func.func @transform_1(%arg0: i32) -> (i32, i32) {
    %c0_i32 = arith.constant 0 : i32
    %c0_i32_0 = arith.constant 0 : i32
    %c0_i32_1 = arith.constant 0 : i32
    return %c0_i32, %c0_i32_0 : i32, i32
  }
  func.func @transform_2(%arg0: i32) -> (i32, i32) {
    %c0_i32 = arith.constant 0 : i32
    %c0_i32_0 = arith.constant 0 : i32
    %c0_i32_1 = arith.constant 0 : i32
    return %c0_i32, %c0_i32_0 : i32, i32
  }
  func.func @transform_3(%arg0: i32) -> (i32, i32) {
    %c0_i32 = arith.constant 0 : i32
    %c0_i32_0 = arith.constant 0 : i32
    %c0_i32_1 = arith.constant 0 : i32
    return %c0_i32, %c0_i32_0 : i32, i32
  }
  func.func @transform_4(%arg0: i32) -> (i32, i32) {
    %c0_i32 = arith.constant 0 : i32
    %c0_i32_0 = arith.constant 0 : i32
    %c0_i32_1 = arith.constant 0 : i32
    return %c0_i32, %c0_i32_0 : i32, i32
  }
  func.func @transform_5(%arg0: i32) -> (i32, i32) {
    %c0_i32 = arith.constant 0 : i32
    %c0_i32_0 = arith.constant 0 : i32
    %c0_i32_1 = arith.constant 0 : i32
    return %c0_i32, %c0_i32_0 : i32, i32
  }
  func.func @transform_6(%arg0: i32) -> (i32, i32) {
    %c0_i32 = arith.constant 0 : i32
    %c0_i32_0 = arith.constant 0 : i32
    return %arg0, %c0_i32 : i32, i32
  }
}

</mosaic_0001>

<llo_original>
// kernel: gaussian_policy_forward.1
$region0: #{gaussian_policy_forward.1}
  #allocation0 [shape = 'u32[]', space=smem, size = 0x4, offset = 0x4, fixed_abs, tag = 'smem constant byte address 0x4 - core index']
  #allocation1 [shape = 'u32[144,128]{1,0:T(1,128)}', space=vmem, size = 0x12000, scoped, tag = 'internal scratch']
  %s0 = inlined_call_operand.vmem [shape: bf16[8,32], index: 0, kind: input, shape index: {}]
  %s1 = inlined_call_operand.vmem [shape: bf16[32,32], index: 1, kind: input, shape index: {}]
  %s2 = inlined_call_operand.vmem [shape: bf16[32,32], index: 2, kind: input, shape index: {}]
  %s3 = inlined_call_operand.vmem [shape: bf16[32,64], index: 3, kind: input, shape index: {}]
  %s4 = inlined_call_operand.vmem [shape: bf16[64,128], index: 4, kind: input, shape index: {}]
  %s5 = inlined_call_operand.vmem [shape: f32[4,128], index: 5, kind: input, shape index: {}]
  %s6 = inlined_call_operand.vmem [shape: f32[8,128], index: 6, kind: output, shape index: {}]
  %s7 = sld [smem:[#allocation0]]
  $region34: #{gaussian_policy_forward.1} parent=0
    _
  %s9 = ssub.s32 1, %s7
  %s10 = scalar_select 0, %s9, %s7
  // Predicated region
  $region2: #{gaussian_policy_forward.1} parent=0 // pred_check
    _
  $region3: #{gaussian_policy_forward.1} parent=0 // pred_check_branch
    %12 = sbr.rel (0) target = $region5
  $region4: #{gaussian_policy_forward.1} parent=0 // pred_region
    _
  $region5: #{gaussian_policy_forward.1} parent=0 // pred_fallthru
    _
  // Predicated region
  $region6: #{gaussian_policy_forward.1} parent=0 // pred_check
    _
  $region7: #{gaussian_policy_forward.1} parent=0 // pred_check_branch
    %14 = sbr.rel (0) target = $region9
  $region8: #{gaussian_policy_forward.1} parent=0 // pred_region
    _
  $region9: #{gaussian_policy_forward.1} parent=0 // pred_fallthru
    _
  // Predicated region
  $region10: #{gaussian_policy_forward.1} parent=0 // pred_check
    _
  $region11: #{gaussian_policy_forward.1} parent=0 // pred_check_branch
    %16 = sbr.rel (0) target = $region13
  $region12: #{gaussian_policy_forward.1} parent=0 // pred_region
    _
  $region13: #{gaussian_policy_forward.1} parent=0 // pred_fallthru
    _
  // Predicated region
  $region14: #{gaussian_policy_forward.1} parent=0 // pred_check
    _
  $region15: #{gaussian_policy_forward.1} parent=0 // pred_check_branch
    %18 = sbr.rel (0) target = $region17
  $region16: #{gaussian_policy_forward.1} parent=0 // pred_region
    _
  $region17: #{gaussian_policy_forward.1} parent=0 // pred_fallthru
    _
  // Predicated region
  $region18: #{gaussian_policy_forward.1} parent=0 // pred_check
    _
  $region19: #{gaussian_policy_forward.1} parent=0 // pred_check_branch
    %20 = sbr.rel (0) target = $region21
  $region20: #{gaussian_policy_forward.1} parent=0 // pred_region
    _
  $region21: #{gaussian_policy_forward.1} parent=0 // pred_fallthru
    _
  // Predicated region
  $region22: #{gaussian_policy_forward.1} parent=0 // pred_check
    _
  $region23: #{gaussian_policy_forward.1} parent=0 // pred_check_branch
    %22 = sbr.rel (0) target = $region25
  $region24: #{gaussian_policy_forward.1} parent=0 // pred_region
    _
  $region25: #{gaussian_policy_forward.1} parent=0 // pred_fallthru
    _
  %v24 = vld [vmem:[%s5] sm:$0x1]
  %v25 = vld [vmem:[%s5 + $0x1] sm:$0x1]
  %v26 = vld [vmem:[%s5 + $0x2] sm:$0x1]
  %v27 = vld [vmem:[%s5 + $0x3] sm:$0x1]
  %v28 = vld [vmem:[%s0] sm:$0xf]
  %v29 = vld [vmem:[%s1] sm:$0xf]
  %v30 = vld [vmem:[%s1 + $0x4] sm:$0xf]
  %v31 = vld [vmem:[%s1 + $0x8] sm:$0xf]
  %v32 = vld [vmem:[%s1 + $0xc] sm:$0xf]
  %v33 = vlaneseq
  %v34 = vshrl.u32 %v33, 7
  %v35 = vsub.s32 0, %v34
  %v36 = vrot.slane %v24, %v35
  %v41 = vunpack.c.l.b16 %v29
  %v42 = vunpack.c.l.b16 %v30
  %v43 = vunpack.c.l.b16 %v31
  %v44 = vunpack.c.l.b16 %v32
  %v45 = vpack.c.b16 %v42, %v41
  %v46 = vpack.c.b16 %v44, %v43
  %vm49 = vcmask 261120
  %v51 = vsel %vm49, %v28, 0
  %53 = vmatprep.subr.bf16.mxu0 0
  %54 = vmatpush1.bf16.msra.mxu0 %v45
  %55 = vmatprep.subr.bf16.mxu0 0
  %56 = vmatpush1.bf16.msra.mxu0 %v46
  %57 = vmatprep.subr.bf16.mxu0 0
  %58 = vmatpush1.bf16.msra.mxu0 0
  %59 = vmatprep.subr.bf16.mxu0 0
  %60 = vmatpush1.bf16.msra.mxu0 0
  %61 = vmatprep.subr.bf16.mxu0 0
  %62 = vmatpush1.bf16.msra.mxu0 0
  %63 = vmatprep.subr.bf16.mxu0 0
  %64 = vmatpush1.bf16.msra.mxu0 0
  %65 = vmatprep.subr.bf16.mxu0 0
  %66 = vmatpush1.bf16.msra.mxu0 0
  %67 = vmatprep.subr.bf16.mxu0 0
  %68 = vmatpush1.bf16.msra.mxu0 0
  %69 = vmatprep.subr.bf16.mxu0 0
  %70 = vmatpush1.bf16.msra.mxu0 0
  %71 = vmatprep.subr.bf16.mxu0 0
  %72 = vmatpush1.bf16.msra.mxu0 0
  %73 = vmatprep.subr.bf16.mxu0 0
  %74 = vmatpush1.bf16.msra.mxu0 0
  %75 = vmatprep.subr.bf16.mxu0 0
  %76 = vmatpush1.bf16.msra.mxu0 0
  %77 = vmatprep.subr.bf16.mxu0 0
  %78 = vmatpush1.bf16.msra.mxu0 0
  %79 = vmatprep.subr.bf16.mxu0 0
  %80 = vmatpush1.bf16.msra.mxu0 0
  %81 = vmatprep.subr.bf16.mxu0 0
  %82 = vmatpush1.bf16.msra.mxu0 0
  %83 = vmatprep.subr.bf16.mxu0 0
  %84 = vmatpush1.bf16.msra.mxu0 0
  %85 = vmatprep.mubr.bf16.mxu0 0
  %86 = vmatmul.mubr.bf16.gmra.mrb[0].mxu0 %v51
  %v87 = vpop.f32.mrb[0].mxu0
  %v88 = vadd.f32 %v36, %v87
  %v89 = vpop.f32.mrb[0].mxu0
  %v90 = vpop.f32.mrb[0].mxu0
  %v91 = vpop.f32.mrb[0].mxu0
  %92 = vdwg.mxu0
  %v93 = vmul.f32 %v88, 0.5
  %v94 = vmul.f32 %v88, 0.70710677
  %v95 = verf.f32.pop %v94
  %v96 = vadd.f32 %v95, 1.0
  %v97 = vmul.f32 %v93, %v96
  %v98 = vpack.c.bf16 %v97, %v97
  %v99 = vld [vmem:[%s2] sm:$0xf]
  %v100 = vld [vmem:[%s2 + $0x4] sm:$0xf]
  %v101 = vld [vmem:[%s2 + $0x8] sm:$0xf]
  %v102 = vld [vmem:[%s2 + $0xc] sm:$0xf]
  %v103 = vlaneseq
  %v104 = vshrl.u32 %v103, 7
  %v105 = vsub.s32 0, %v104
  %v106 = vrot.slane %v25, %v105
  %v111 = vunpack.c.l.b16 %v99
  %v112 = vunpack.c.l.b16 %v100
  %v113 = vunpack.c.l.b16 %v101
  %v114 = vunpack.c.l.b16 %v102
  %v115 = vpack.c.b16 %v112, %v111
  %v116 = vpack.c.b16 %v114, %v113
  %v120 = vsel %vm49, %v98, 0
  %122 = vmatprep.subr.bf16.mxu0 0
  %123 = vmatpush1.bf16.msra.mxu0 %v115
  %124 = vmatprep.subr.bf16.mxu0 0
  %125 = vmatpush1.bf16.msra.mxu0 %v116
  %126 = vmatprep.subr.bf16.mxu0 0
  %127 = vmatpush1.bf16.msra.mxu0 0
  %128 = vmatprep.subr.bf16.mxu0 0
  %129 = vmatpush1.bf16.msra.mxu0 0
  %130 = vmatprep.subr.bf16.mxu0 0
  %131 = vmatpush1.bf16.msra.mxu0 0
  %132 = vmatprep.subr.bf16.mxu0 0
  %133 = vmatpush1.bf16.msra.mxu0 0
  %134 = vmatprep.subr.bf16.mxu0 0
  %135 = vmatpush1.bf16.msra.mxu0 0
  %136 = vmatprep.subr.bf16.mxu0 0
  %137 = vmatpush1.bf16.msra.mxu0 0
  %138 = vmatprep.subr.bf16.mxu0 0
  %139 = vmatpush1.bf16.msra.mxu0 0
  %140 = vmatprep.subr.bf16.mxu0 0
  %141 = vmatpush1.bf16.msra.mxu0 0
  %142 = vmatprep.subr.bf16.mxu0 0
  %143 = vmatpush1.bf16.msra.mxu0 0
  %144 = vmatprep.subr.bf16.mxu0 0
  %145 = vmatpush1.bf16.msra.mxu0 0
  %146 = vmatprep.subr.bf16.mxu0 0
  %147 = vmatpush1.bf16.msra.mxu0 0
  %148 = vmatprep.subr.bf16.mxu0 0
  %149 = vmatpush1.bf16.msra.mxu0 0
  %150 = vmatprep.subr.bf16.mxu0 0
  %151 = vmatpush1.bf16.msra.mxu0 0
  %152 = vmatprep.subr.bf16.mxu0 0
  %153 = vmatpush1.bf16.msra.mxu0 0
  %154 = vmatprep.mubr.bf16.mxu0 0
  %155 = vmatmul.mubr.bf16.gmra.mrb[0].mxu0 %v120
  %v156 = vpop.f32.mrb[0].mxu0
  %v157 = vadd.f32 %v106, %v156
  %v158 = vpop.f32.mrb[0].mxu0
  %v159 = vpop.f32.mrb[0].mxu0
  %v160 = vpop.f32.mrb[0].mxu0
  %161 = vdwg.mxu0
  %v162 = vmul.f32 %v157, 0.5
  %v163 = vmul.f32 %v157, 0.70710677
  %v164 = verf.f32.pop %v163
  %v165 = vadd.f32 %v164, 1.0
  %v166 = vmul.f32 %v162, %v165
  %v167 = vpack.c.bf16 %v166, %v166
  %v168 = vld [vmem:[%s3] sm:$0xf]
  %v169 = vld [vmem:[%s3 + $0x4] sm:$0xf]
  %v170 = vld [vmem:[%s3 + $0x8] sm:$0xf]
  %v171 = vld [vmem:[%s3 + $0xc] sm:$0xf]
  %v172 = vlaneseq
  %v173 = vshrl.u32 %v172, 7
  %v174 = vsub.s32 0, %v173
  %v175 = vrot.slane %v26, %v174
  %v180 = vunpack.c.l.b16 %v168
  %v181 = vunpack.c.l.b16 %v169
  %v182 = vunpack.c.l.b16 %v170
  %v183 = vunpack.c.l.b16 %v171
  %v184 = vpack.c.b16 %v181, %v180
  %v185 = vpack.c.b16 %v183, %v182
  %v189 = vsel %vm49, %v167, 0
  %191 = vmatprep.subr.bf16.mxu0 0
  %192 = vmatpush1.bf16.msra.mxu0 %v184
  %193 = vmatprep.subr.bf16.mxu0 0
  %194 = vmatpush1.bf16.msra.mxu0 %v185
  %195 = vmatprep.subr.bf16.mxu0 0
  %196 = vmatpush1.bf16.msra.mxu0 0
  %197 = vmatprep.subr.bf16.mxu0 0
  %198 = vmatpush1.bf16.msra.mxu0 0
  %199 = vmatprep.subr.bf16.mxu0 0
  %200 = vmatpush1.bf16.msra.mxu0 0
  %201 = vmatprep.subr.bf16.mxu0 0
  %202 = vmatpush1.bf16.msra.mxu0 0
  %203 = vmatprep.subr.bf16.mxu0 0
  %204 = vmatpush1.bf16.msra.mxu0 0
  %205 = vmatprep.subr.bf16.mxu0 0
  %206 = vmatpush1.bf16.msra.mxu0 0
  %207 = vmatprep.subr.bf16.mxu0 0
  %208 = vmatpush1.bf16.msra.mxu0 0
  %209 = vmatprep.subr.bf16.mxu0 0
  %210 = vmatpush1.bf16.msra.mxu0 0
  %211 = vmatprep.subr.bf16.mxu0 0
  %212 = vmatpush1.bf16.msra.mxu0 0
  %213 = vmatprep.subr.bf16.mxu0 0
  %214 = vmatpush1.bf16.msra.mxu0 0
  %215 = vmatprep.subr.bf16.mxu0 0
  %216 = vmatpush1.bf16.msra.mxu0 0
  %217 = vmatprep.subr.bf16.mxu0 0
  %218 = vmatpush1.bf16.msra.mxu0 0
  %219 = vmatprep.subr.bf16.mxu0 0
  %220 = vmatpush1.bf16.msra.mxu0 0
  %221 = vmatprep.subr.bf16.mxu0 0
  %222 = vmatpush1.bf16.msra.mxu0 0
  %223 = vmatprep.mubr.bf16.mxu0 0
  %224 = vmatmul.mubr.bf16.gmra.mrb[0].mxu0 %v189
  %v225 = vpop.f32.mrb[0].mxu0
  %v226 = vadd.f32 %v175, %v225
  %v227 = vpop.f32.mrb[0].mxu0
  %v228 = vpop.f32.mrb[0].mxu0
  %v229 = vpop.f32.mrb[0].mxu0
  %230 = vdwg.mxu0
  %v231 = vmul.f32 %v226, 0.5
  %v232 = vmul.f32 %v226, 0.70710677
  %v233 = verf.f32.pop %v232
  %v234 = vadd.f32 %v233, 1.0
  %v235 = vmul.f32 %v231, %v234
  %v236 = vpack.c.bf16 %v235, %v235
  %v237 = vld [vmem:[%s4] sm:$0xf]
  %v238 = vld [vmem:[%s4 + $0x4] sm:$0xf]
  %v239 = vld [vmem:[%s4 + $0x8] sm:$0xf]
  %v240 = vld [vmem:[%s4 + $0xc] sm:$0xf]
  %v241 = vld [vmem:[%s4 + $0x10] sm:$0xf]
  %v242 = vld [vmem:[%s4 + $0x14] sm:$0xf]
  %v243 = vld [vmem:[%s4 + $0x18] sm:$0xf]
  %v244 = vld [vmem:[%s4 + $0x1c] sm:$0xf]
  %v245 = vlaneseq
  %v246 = vshrl.u32 %v245, 7
  %v247 = vsub.s32 0, %v246
  %v248 = vrot.slane %v27, %v247
  %v257 = vunpack.c.l.b16 %v237
  %v258 = vunpack.c.l.b16 %v238
  %v259 = vunpack.c.l.b16 %v239
  %v260 = vunpack.c.l.b16 %v240
  %v261 = vunpack.c.l.b16 %v241
  %v262 = vunpack.c.l.b16 %v242
  %v263 = vunpack.c.l.b16 %v243
  %v264 = vunpack.c.l.b16 %v244
  %v265 = vpack.c.b16 %v258, %v257
  %v266 = vpack.c.b16 %v260, %v259
  %v267 = vpack.c.b16 %v262, %v261
  %v268 = vpack.c.b16 %v264, %v263
  %vm273 = vcmask 523264
  %v275 = vsel %vm273, %v236, 0
  %277 = vmatprep.subr.bf16.mxu0 0
  %278 = vmatpush1.bf16.msra.mxu0 %v265
  %279 = vmatprep.subr.bf16.mxu0 0
  %280 = vmatpush1.bf16.msra.mxu0 %v266
  %281 = vmatprep.subr.bf16.mxu0 0
  %282 = vmatpush1.bf16.msra.mxu0 %v267
  %283 = vmatprep.subr.bf16.mxu0 0
  %284 = vmatpush1.bf16.msra.mxu0 %v268
  %285 = vmatprep.subr.bf16.mxu0 0
  %286 = vmatpush1.bf16.msra.mxu0 0
  %287 = vmatprep.subr.bf16.mxu0 0
  %288 = vmatpush1.bf16.msra.mxu0 0
  %289 = vmatprep.subr.bf16.mxu0 0
  %290 = vmatpush1.bf16.msra.mxu0 0
  %291 = vmatprep.subr.bf16.mxu0 0
  %292 = vmatpush1.bf16.msra.mxu0 0
  %293 = vmatprep.subr.bf16.mxu0 0
  %294 = vmatpush1.bf16.msra.mxu0 0
  %295 = vmatprep.subr.bf16.mxu0 0
  %296 = vmatpush1.bf16.msra.mxu0 0
  %297 = vmatprep.subr.bf16.mxu0 0
  %298 = vmatpush1.bf16.msra.mxu0 0
  %299 = vmatprep.subr.bf16.mxu0 0
  %300 = vmatpush1.bf16.msra.mxu0 0
  %301 = vmatprep.subr.bf16.mxu0 0
  %302 = vmatpush1.bf16.msra.mxu0 0
  %303 = vmatprep.subr.bf16.mxu0 0
  %304 = vmatpush1.bf16.msra.mxu0 0
  %305 = vmatprep.subr.bf16.mxu0 0
  %306 = vmatpush1.bf16.msra.mxu0 0
  %307 = vmatprep.subr.bf16.mxu0 0
  %308 = vmatpush1.bf16.msra.mxu0 0
  %309 = vmatprep.mubr.bf16.mxu0 0
  %310 = vmatmul.mubr.bf16.gmra.mrb[0].mxu0 %v275
  %v311 = vpop.f32.mrb[0].mxu0
  %v312 = vadd.f32 %v248, %v311
  %v313 = vpop.f32.mrb[0].mxu0
  %v314 = vpop.f32.mrb[0].mxu0
  %v315 = vpop.f32.mrb[0].mxu0
  %316 = vdwg.mxu0
  %v317 = vlaneseq
  %v318 = vand.u32 %v317, 127
  %vm319 = vcmp.ge.s32.totalorder %v318, 8
  %vm320 = vcmp.lt.s32.totalorder %v318, 16
  %vm321 = vmand %vm319, %vm320
  %v322 = vmax.f32 %v312, -20.0
  %v323 = vmin.f32 %v322, 2.0
  %v324 = vmul.f32 %v323, 1.442695
  %v325 = vpow.pop %v324
  %v326 = vadd.f32 %v325, 1.0
  %v327 = vlog2.pop %v326
  %v328 = vmul.f32 %v327, 0.6931472
  %v329 = vmul.f32 -0.5, %v325
  %v330 = vadd.f32 %v329, 1.0
  %v331 = vmul.f32 %v330, %v325
  %v332 = vand.u32 2147483647, %v325
  %vm333 = vcmp.lt.f32.partialorder %v332, 0.0004427343
  %v334 = vsel %vm333, %v331, %v328
  %v335 = vadd.f32 %v334, 0.0001
  %v336 = vlog2.pop %v335
  %v337 = vmul.f32 %v336, 0.6931472
  %v338 = vsel %vm321, %v337, %v312
  %339 = vst [vmem:[%s6] sm:$0xff] %v338
  // Predicated region
  $region26: #{gaussian_policy_forward.1} parent=0 // pred_check
    _
  $region27: #{gaussian_policy_forward.1} parent=0 // pred_check_branch
    %341 = sbr.rel (0) target = $region29
  $region28: #{gaussian_policy_forward.1} parent=0 // pred_region
    _
  $region29: #{gaussian_policy_forward.1} parent=0 // pred_fallthru
    _
  // Predicated region
  $region30: #{gaussian_policy_forward.1} parent=0 // pred_check
    _
  $region31: #{gaussian_policy_forward.1} parent=0 // pred_check_branch
    %343 = sbr.rel (0) target = $region33
  $region32: #{gaussian_policy_forward.1} parent=0 // pred_region
    _
  $region33: #{gaussian_policy_forward.1} parent=0 // pred_fallthru
    _

</llo_original>
